<compile_context>
chip_gen: v5e
topology: v5e:2x2
jax: 0.10.0
libtpu: 0.0.40
codegen_flags: <defaults>
</compile_context>

<pallas_src>
import functools

import jax
import jax.numpy as jnp
from jax.experimental import pallas as pl
from jax.experimental.pallas import tpu as pltpu

LANE = 128
SUBLANE = 8


def _round_up(v, m):
    return ((v + m - 1) // m) * m


def _pad2d(a, rows, cols):
    r, c = a.shape
    if r == rows and c == cols:
        return a
    return jnp.pad(a, ((0, rows - r), (0, cols - c)))


# ----------------------------------------------------------------------------
# Fused Encoder kernel: one grid step = one batch tile through the whole net.
# ----------------------------------------------------------------------------
def _encoder_kernel(*refs, n_hidden):
    # refs = [x, (w_i, b_i) * n_hidden, w_mu, b_mu, w_lv, b_lv, eps,
    #         z_out, mu_out, lv_out]
    n_in = 1 + 2 * n_hidden + 4 + 1
    in_refs = refs[:n_in]
    z_ref, mu_ref, lv_ref = refs[n_in:n_in + 3]

    x_ref = in_refs[0]
    h = x_ref[...].astype(jnp.float32)

    idx = 1
    for _ in range(n_hidden):
        w_ref = in_refs[idx]
        b_ref = in_refs[idx + 1]
        idx += 2
        # MXU matmul in bf16, f32 accumulation; f32 epilogue (bias + ReLU).
        y = jnp.dot(h.astype(jnp.bfloat16), w_ref[...],
                    preferred_element_type=jnp.float32)
        y = y + b_ref[...]
        h = jnp.maximum(y, 0.0)
        # TODO(synk): nn.Dropout(p) is treated as identity (inference-mode forward).

    w_mu_ref, b_mu_ref, w_lv_ref, b_lv_ref, eps_ref = in_refs[idx:idx + 5]
    hb = h.astype(jnp.bfloat16)
    mu = jnp.dot(hb, w_mu_ref[...], preferred_element_type=jnp.float32) + b_mu_ref[...]
    lv = jnp.dot(hb, w_lv_ref[...], preferred_element_type=jnp.float32) + b_lv_ref[...]
    # reparametrize: z = mu + exp(0.5 * log_var) * eps   (exp goes to the EUP)
    z = mu + jnp.exp(0.5 * lv) * eps_ref[...]

    z_ref[...] = z.astype(z_ref.dtype)
    mu_ref[...] = mu.astype(mu_ref.dtype)
    lv_ref[...] = lv.astype(lv_ref.dtype)


# ----------------------------------------------------------------------------
# Wrapper: padding, BlockSpecs, single pallas_call.
# ----------------------------------------------------------------------------
def encoder_forward(params, x, eps):
    """Mirror of Encoder.forward: returns (z, mu, log_var).

    params: {"hidden": [(w [in,out], b [1,out]), ...],
             "mu": (w, b), "log_var": (w, b)}  (all f32)
    x:   [batch, x_dim] f32
    eps: [batch, z_dim] f32 standard-normal sample (torch.randn equivalent)
    """
    M, x_dim = x.shape
    hidden = params["hidden"]
    n_hidden = len(hidden)
    w_mu, _ = params["mu"]
    z_dim = w_mu.shape[1]

    # Sublane-aligned batch tile, lane-aligned feature dims.
    tm = min(128, _round_up(M, SUBLANE))
    Mp = _round_up(M, tm)
    dims = [x_dim] + [w.shape[1] for (w, _) in hidden]
    pdims = [_round_up(d, LANE) for d in dims]
    Zp = _round_up(z_dim, LANE)

    xp = _pad2d(x.astype(jnp.float32), Mp, pdims[0])
    epsp = _pad2d(eps.astype(jnp.float32), Mp, Zp)

    operands = [xp]
    in_specs = [pl.BlockSpec((tm, pdims[0]), lambda i: (i, 0))]

    # Hidden-layer weights: cast to bf16 ONCE here (half the DMA/VMEM bytes).
    for li, (w, b) in enumerate(hidden):
        kp, np_ = pdims[li], pdims[li + 1]
        operands.append(_pad2d(w.astype(jnp.bfloat16), kp, np_))
        in_specs.append(pl.BlockSpec((kp, np_), lambda i: (0, 0)))
        operands.append(_pad2d(b.astype(jnp.float32), 1, np_))
        in_specs.append(pl.BlockSpec((1, np_), lambda i: (0, 0)))

    hp = pdims[-1]
    for (w, b) in (params["mu"], params["log_var"]):
        operands.append(_pad2d(w.astype(jnp.bfloat16), hp, Zp))
        in_specs.append(pl.BlockSpec((hp, Zp), lambda i: (0, 0)))
        operands.append(_pad2d(b.astype(jnp.float32), 1, Zp))
        in_specs.append(pl.BlockSpec((1, Zp), lambda i: (0, 0)))

    operands.append(epsp)
    in_specs.append(pl.BlockSpec((tm, Zp), lambda i: (i, 0)))

    out_spec = pl.BlockSpec((tm, Zp), lambda i: (i, 0))
    out_shape = jax.ShapeDtypeStruct((Mp, Zp), jnp.float32)

    z_p, mu_p, lv_p = pl.pallas_call(
        functools.partial(_encoder_kernel, n_hidden=n_hidden),
        out_shape=(out_shape, out_shape, out_shape),
        grid_spec=pltpu.PrefetchScalarGridSpec(
            num_scalar_prefetch=0,
            grid=(Mp // tm,),
            in_specs=in_specs,
            out_specs=(out_spec, out_spec, out_spec),
        ),
        compiler_params=pltpu.CompilerParams(
            dimension_semantics=("parallel",)),
    )(*operands)

    return z_p[:M, :z_dim], mu_p[:M, :z_dim], lv_p[:M, :z_dim]


# ----------------------------------------------------------------------------
# Parameter init mimicking nn.Linear (uniform +/- 1/sqrt(fan_in)); weights are
# stored [in_features, out_features] so the kernel computes x @ W + b.
# ----------------------------------------------------------------------------
def init_encoder_params(key, x_dim, h_dims, z_dim):
    def linear(k, fan_in, fan_out):
        kw, kb = jax.random.split(k)
        bound = 1.0 / jnp.sqrt(fan_in)
        w = jax.random.uniform(kw, (fan_in, fan_out), jnp.float32, -bound, bound)
        b = jax.random.uniform(kb, (1, fan_out), jnp.float32, -bound, bound)
        return w, b

    params = {"hidden": []}
    dims = [x_dim] + list(h_dims)
    for i in range(1, len(dims)):
        key, k = jax.random.split(key)
        params["hidden"].append(linear(k, dims[i - 1], dims[i]))
    key, km, kv = jax.random.split(key, 3)
    params["mu"] = linear(km, dims[-1], z_dim)
    params["log_var"] = linear(kv, dims[-1], z_dim)
    return params


# Pure-JAX reference (same bf16-matmul / f32-accumulate numerics as the kernel).
def _reference_forward(params, x, eps):
    def mm(a, w):
        return jnp.dot(a.astype(jnp.bfloat16), w.astype(jnp.bfloat16),
                       preferred_element_type=jnp.float32)

    h = x.astype(jnp.float32)
    for (w, b) in params["hidden"]:
        h = jnp.maximum(mm(h, w) + b, 0.0)
    mu = mm(h, params["mu"][0]) + params["mu"][1]
    lv = mm(h, params["log_var"][0]) + params["log_var"][1]
    z = mu + jnp.exp(0.5 * lv) * eps
    return z, mu, lv


if __name__ == "__main__":
    # dims = [x_dim, h_dim(list), z_dim] as in Encoder([x_dim, h_dim, z_dim])
    x_dim, h_dims, z_dim = 32, [64, 32], 16
    batch = 8

    key = jax.random.PRNGKey(0)
    key, kx, keps = jax.random.split(key, 3)
    x = jax.random.normal(kx, (batch, x_dim), jnp.float32)
    eps = jax.random.normal(keps, (batch, z_dim), jnp.float32)  # torch.randn equivalent
    params = init_encoder_params(key, x_dim, h_dims, z_dim)

    z, mu, lv = encoder_forward(params, x, eps)
    jax.block_until_ready((z, mu, lv))

    rz, rmu, rlv = _reference_forward(params, x, eps)
    assert z.shape == (batch, z_dim)
    assert mu.shape == (batch, z_dim)
    assert lv.shape == (batch, z_dim)
    assert jnp.allclose(mu, rmu, atol=2e-3, rtol=2e-3), float(jnp.max(jnp.abs(mu - rmu)))
    assert jnp.allclose(lv, rlv, atol=2e-3, rtol=2e-3), float(jnp.max(jnp.abs(lv - rlv)))
    assert jnp.allclose(z, rz, atol=5e-3, rtol=5e-3), float(jnp.max(jnp.abs(z - rz)))

    print("KERNEL_OK")
</pallas_src>

<mosaic_0001>
module attributes {stable_mosaic.version = 11 : i64} {
  func.func @_encoder_kernel(%arg0: i32, %arg1: memref<8x128xf32, #tpu.memory_space<vmem>>, %arg2: memref<128x128xbf16, #tpu.memory_space<vmem>>, %arg3: memref<1x128xf32, #tpu.memory_space<vmem>>, %arg4: memref<128x128xbf16, #tpu.memory_space<vmem>>, %arg5: memref<1x128xf32, #tpu.memory_space<vmem>>, %arg6: memref<128x128xbf16, #tpu.memory_space<vmem>>, %arg7: memref<1x128xf32, #tpu.memory_space<vmem>>, %arg8: memref<128x128xbf16, #tpu.memory_space<vmem>>, %arg9: memref<1x128xf32, #tpu.memory_space<vmem>>, %arg10: memref<8x128xf32, #tpu.memory_space<vmem>>, %arg11: memref<8x128xf32, #tpu.memory_space<vmem>>, %arg12: memref<8x128xf32, #tpu.memory_space<vmem>>, %arg13: memref<8x128xf32, #tpu.memory_space<vmem>>) attributes {dimension_semantics = [#tpu.dimension_semantics<parallel>], iteration_bounds = array<i64: 1>, scalar_prefetch = 0 : i64, scratch_operands = 0 : i64, tpu.core_type = #tpu.core_type<tc>, window_params = [{transform_indices = @transform_0, window_bounds = array<i64: 8, 128>}, {pipeline_mode = #tpu.pipeline_mode<synchronous>, transform_indices = @transform_1, window_bounds = array<i64: 128, 128>}, {pipeline_mode = #tpu.pipeline_mode<synchronous>, transform_indices = @transform_2, window_bounds = array<i64: 1, 128>}, {pipeline_mode = #tpu.pipeline_mode<synchronous>, transform_indices = @transform_3, window_bounds = array<i64: 128, 128>}, {pipeline_mode = #tpu.pipeline_mode<synchronous>, transform_indices = @transform_4, window_bounds = array<i64: 1, 128>}, {pipeline_mode = #tpu.pipeline_mode<synchronous>, transform_indices = @transform_5, window_bounds = array<i64: 128, 128>}, {pipeline_mode = #tpu.pipeline_mode<synchronous>, transform_indices = @transform_6, window_bounds = array<i64: 1, 128>}, {pipeline_mode = #tpu.pipeline_mode<synchronous>, transform_indices = @transform_7, window_bounds = array<i64: 128, 128>}, {pipeline_mode = #tpu.pipeline_mode<synchronous>, transform_indices = @transform_8, window_bounds = array<i64: 1, 128>}, {transform_indices = @transform_9, window_bounds = array<i64: 8, 128>}, {transform_indices = @transform_10, window_bounds = array<i64: 8, 128>}, {transform_indices = @transform_11, window_bounds = array<i64: 8, 128>}, {transform_indices = @transform_12, window_bounds = array<i64: 8, 128>}]} {
    %c0 = arith.constant 0 : index
    %c0_0 = arith.constant 0 : index
    %0 = vector.load %arg1[%c0, %c0_0] : memref<8x128xf32, #tpu.memory_space<vmem>>, vector<8x128xf32>
    %1 = arith.truncf %0 : vector<8x128xf32> to vector<8x128xbf16>
    %c0_1 = arith.constant 0 : index
    %c0_2 = arith.constant 0 : index
    %2 = vector.load %arg2[%c0_1, %c0_2] : memref<128x128xbf16, #tpu.memory_space<vmem>>, vector<128x128xbf16>
    %cst = arith.constant dense<0.000000e+00> : vector<8x128xf32>
    %3 = tpu.matmul %1, %2, %cst {dimension_numbers = #tpu.dot_dimension_numbers<[1], [0], [0], [1], [0, 0, 1, 1], [], []>} : vector<8x128xbf16>, vector<128x128xbf16>, vector<8x128xf32> -> vector<8x128xf32>
    %c0_3 = arith.constant 0 : index
    %c0_4 = arith.constant 0 : index
    %4 = vector.load %arg3[%c0_3, %c0_4] : memref<1x128xf32, #tpu.memory_space<vmem>>, vector<1x128xf32>
    %5 = vector.broadcast %4 : vector<1x128xf32> to vector<8x128xf32>
    %6 = arith.addf %3, %5 : vector<8x128xf32>
    %cst_5 = arith.constant 0.000000e+00 : f32
    %7 = vector.broadcast %cst_5 : f32 to vector<8x128xf32>
    %8 = arith.maximumf %6, %7 : vector<8x128xf32>
    %9 = arith.truncf %8 : vector<8x128xf32> to vector<8x128xbf16>
    %c0_6 = arith.constant 0 : index
    %c0_7 = arith.constant 0 : index
    %10 = vector.load %arg4[%c0_6, %c0_7] : memref<128x128xbf16, #tpu.memory_space<vmem>>, vector<128x128xbf16>
    %cst_8 = arith.constant dense<0.000000e+00> : vector<8x128xf32>
    %11 = tpu.matmul %9, %10, %cst_8 {dimension_numbers = #tpu.dot_dimension_numbers<[1], [0], [0], [1], [0, 0, 1, 1], [], []>} : vector<8x128xbf16>, vector<128x128xbf16>, vector<8x128xf32> -> vector<8x128xf32>
    %c0_9 = arith.constant 0 : index
    %c0_10 = arith.constant 0 : index
    %12 = vector.load %arg5[%c0_9, %c0_10] : memref<1x128xf32, #tpu.memory_space<vmem>>, vector<1x128xf32>
    %13 = vector.broadcast %12 : vector<1x128xf32> to vector<8x128xf32>
    %14 = arith.addf %11, %13 : vector<8x128xf32>
    %cst_11 = arith.constant 0.000000e+00 : f32
    %15 = vector.broadcast %cst_11 : f32 to vector<8x128xf32>
    %16 = arith.maximumf %14, %15 : vector<8x128xf32>
    %17 = arith.truncf %16 : vector<8x128xf32> to vector<8x128xbf16>
    %c0_12 = arith.constant 0 : index
    %c0_13 = arith.constant 0 : index
    %18 = vector.load %arg6[%c0_12, %c0_13] : memref<128x128xbf16, #tpu.memory_space<vmem>>, vector<128x128xbf16>
    %cst_14 = arith.constant dense<0.000000e+00> : vector<8x128xf32>
    %19 = tpu.matmul %17, %18, %cst_14 {dimension_numbers = #tpu.dot_dimension_numbers<[1], [0], [0], [1], [0, 0, 1, 1], [], []>} : vector<8x128xbf16>, vector<128x128xbf16>, vector<8x128xf32> -> vector<8x128xf32>
    %c0_15 = arith.constant 0 : index
    %c0_16 = arith.constant 0 : index
    %20 = vector.load %arg7[%c0_15, %c0_16] : memref<1x128xf32, #tpu.memory_space<vmem>>, vector<1x128xf32>
    %21 = vector.broadcast %20 : vector<1x128xf32> to vector<8x128xf32>
    %22 = arith.addf %19, %21 : vector<8x128xf32>
    %c0_17 = arith.constant 0 : index
    %c0_18 = arith.constant 0 : index
    %23 = vector.load %arg8[%c0_17, %c0_18] : memref<128x128xbf16, #tpu.memory_space<vmem>>, vector<128x128xbf16>
    %cst_19 = arith.constant dense<0.000000e+00> : vector<8x128xf32>
    %24 = tpu.matmul %17, %23, %cst_19 {dimension_numbers = #tpu.dot_dimension_numbers<[1], [0], [0], [1], [0, 0, 1, 1], [], []>} : vector<8x128xbf16>, vector<128x128xbf16>, vector<8x128xf32> -> vector<8x128xf32>
    %c0_20 = arith.constant 0 : index
    %c0_21 = arith.constant 0 : index
    %25 = vector.load %arg9[%c0_20, %c0_21] : memref<1x128xf32, #tpu.memory_space<vmem>>, vector<1x128xf32>
    %26 = vector.broadcast %25 : vector<1x128xf32> to vector<8x128xf32>
    %27 = arith.addf %24, %26 : vector<8x128xf32>
    %cst_22 = arith.constant 5.000000e-01 : f32
    %28 = vector.broadcast %cst_22 : f32 to vector<8x128xf32>
    %29 = arith.mulf %28, %27 : vector<8x128xf32>
    %30 = math.exp %29 : vector<8x128xf32>
    %c0_23 = arith.constant 0 : index
    %c0_24 = arith.constant 0 : index
    %31 = vector.load %arg10[%c0_23, %c0_24] : memref<8x128xf32, #tpu.memory_space<vmem>>, vector<8x128xf32>
    %32 = arith.mulf %30, %31 : vector<8x128xf32>
    %33 = arith.addf %22, %32 : vector<8x128xf32>
    %c0_25 = arith.constant 0 : index
    %c0_26 = arith.constant 0 : index
    %34 = vector.load %arg11[%c0_25, %c0_26] : memref<8x128xf32, #tpu.memory_space<vmem>>, vector<8x128xf32>
    tpu.vector_store %arg11[%c0_25, %c0_26], %33 {strides = array<i32>} : memref<8x128xf32, #tpu.memory_space<vmem>>, vector<8x128xf32>,
    %c0_27 = arith.constant 0 : index
    %c0_28 = arith.constant 0 : index
    %35 = vector.load %arg12[%c0_27, %c0_28] : memref<8x128xf32, #tpu.memory_space<vmem>>, vector<8x128xf32>
    tpu.vector_store %arg12[%c0_27, %c0_28], %22 {strides = array<i32>} : memref<8x128xf32, #tpu.memory_space<vmem>>, vector<8x128xf32>,
    %c0_29 = arith.constant 0 : index
    %c0_30 = arith.constant 0 : index
    %36 = vector.load %arg13[%c0_29, %c0_30] : memref<8x128xf32, #tpu.memory_space<vmem>>, vector<8x128xf32>
    tpu.vector_store %arg13[%c0_29, %c0_30], %27 {strides = array<i32>} : memref<8x128xf32, #tpu.memory_space<vmem>>, vector<8x128xf32>,
    return
  }
  func.func @transform_0(%arg0: i32) -> (i32, i32) {
    %c0_i32 = arith.constant 0 : i32
    %c0_i32_0 = arith.constant 0 : i32
    return %arg0, %c0_i32 : i32, i32
  }
  func.func @transform_1(%arg0: i32) -> (i32, i32) {
    %c0_i32 = arith.constant 0 : i32
    %c0_i32_0 = arith.constant 0 : i32
    %c0_i32_1 = arith.constant 0 : i32
    return %c0_i32, %c0_i32_0 : i32, i32
  }
  func.func @transform_2(%arg0: i32) -> (i32, i32) {
    %c0_i32 = arith.constant 0 : i32
    %c0_i32_0 = arith.constant 0 : i32
    %c0_i32_1 = arith.constant 0 : i32
    return %c0_i32, %c0_i32_0 : i32, i32
  }
  func.func @transform_3(%arg0: i32) -> (i32, i32) {
    %c0_i32 = arith.constant 0 : i32
    %c0_i32_0 = arith.constant 0 : i32
    %c0_i32_1 = arith.constant 0 : i32
    return %c0_i32, %c0_i32_0 : i32, i32
  }
  func.func @transform_4(%arg0: i32) -> (i32, i32) {
    %c0_i32 = arith.constant 0 : i32
    %c0_i32_0 = arith.constant 0 : i32
    %c0_i32_1 = arith.constant 0 : i32
    return %c0_i32, %c0_i32_0 : i32, i32
  }
  func.func @transform_5(%arg0: i32) -> (i32, i32) {
    %c0_i32 = arith.constant 0 : i32
    %c0_i32_0 = arith.constant 0 : i32
    %c0_i32_1 = arith.constant 0 : i32
    return %c0_i32, %c0_i32_0 : i32, i32
  }
  func.func @transform_6(%arg0: i32) -> (i32, i32) {
    %c0_i32 = arith.constant 0 : i32
    %c0_i32_0 = arith.constant 0 : i32
    %c0_i32_1 = arith.constant 0 : i32
    return %c0_i32, %c0_i32_0 : i32, i32
  }
  func.func @transform_7(%arg0: i32) -> (i32, i32) {
    %c0_i32 = arith.constant 0 : i32
    %c0_i32_0 = arith.constant 0 : i32
    %c0_i32_1 = arith.constant 0 : i32
    return %c0_i32, %c0_i32_0 : i32, i32
  }
  func.func @transform_8(%arg0: i32) -> (i32, i32) {
    %c0_i32 = arith.constant 0 : i32
    %c0_i32_0 = arith.constant 0 : i32
    %c0_i32_1 = arith.constant 0 : i32
    return %c0_i32, %c0_i32_0 : i32, i32
  }
  func.func @transform_9(%arg0: i32) -> (i32, i32) {
    %c0_i32 = arith.constant 0 : i32
    %c0_i32_0 = arith.constant 0 : i32
    return %arg0, %c0_i32 : i32, i32
  }
  func.func @transform_10(%arg0: i32) -> (i32, i32) {
    %c0_i32 = arith.constant 0 : i32
    %c0_i32_0 = arith.constant 0 : i32
    return %arg0, %c0_i32 : i32, i32
  }
  func.func @transform_11(%arg0: i32) -> (i32, i32) {
    %c0_i32 = arith.constant 0 : i32
    %c0_i32_0 = arith.constant 0 : i32
    return %arg0, %c0_i32 : i32, i32
  }
  func.func @transform_12(%arg0: i32) -> (i32, i32) {
    %c0_i32 = arith.constant 0 : i32
    %c0_i32_0 = arith.constant 0 : i32
    return %arg0, %c0_i32 : i32, i32
  }
}

</mosaic_0001>

<llo_original>
// kernel: tpu_custom_call.1
$region0: #{tpu_custom_call.1}
  #allocation0 [shape = 'u32[]', space=smem, size = 0x4, offset = 0x4, fixed_abs, tag = 'smem constant byte address 0x4 - core index']
  #allocation1 [shape = 'u32[72,128]{1,0:T(1,128)}', space=vmem, size = 0x9000, scoped, tag = 'internal scratch']
  %s0 = inlined_call_operand.hbm [shape: f32[8,128], index: 0, kind: input, shape index: {}]
  %s1 = inlined_call_operand.hbm [shape: bf16[128,128], index: 1, kind: input, shape index: {}]
  %s2 = inlined_call_operand.hbm [shape: f32[1,128], index: 2, kind: input, shape index: {}]
  %s3 = inlined_call_operand.hbm [shape: bf16[128,128], index: 3, kind: input, shape index: {}]
  %s4 = inlined_call_operand.hbm [shape: f32[1,128], index: 4, kind: input, shape index: {}]
  %s5 = inlined_call_operand.hbm [shape: bf16[128,128], index: 5, kind: input, shape index: {}]
  %s6 = inlined_call_operand.hbm [shape: f32[1,128], index: 6, kind: input, shape index: {}]
  %s7 = inlined_call_operand.hbm [shape: bf16[128,128], index: 7, kind: input, shape index: {}]
  %s8 = inlined_call_operand.hbm [shape: f32[1,128], index: 8, kind: input, shape index: {}]
  %s9 = inlined_call_operand.vmem [shape: f32[8,128], index: 9, kind: input, shape index: {}]
  %s10 = inlined_call_operand.hbm [shape: f32[8,128], index: 10, kind: output, shape index: {0}]
  %s11 = inlined_call_operand.hbm [shape: f32[8,128], index: 11, kind: output, shape index: {1}]
  %s12 = inlined_call_operand.hbm [shape: f32[8,128], index: 12, kind: output, shape index: {2}]
  %13 = xla_tuple %s10, %s11, %s12
  %s14 = sld [smem:[#allocation0]]
  $region102: #{tpu_custom_call.1} parent=0
    _
  %s16 = ssub.s32 1, %s14
  %s17 = scalar_select 0, %s16, %s14
  $region1: #{tpu_custom_call.1} parent=0
    #allocation2 [shape = 'u8[4096]{0}', space=vmem, size = 0x1000, scoped, tag = 'input window, operand 0, single buffered']
    #allocation3 [shape = 's32[1]{0}', space=sflag, size = 0x4, scoped, tag = 'scoped memory for tpu_custom_call.1']
    #allocation4 [shape = 's32[1]{0}', space=sflag, size = 0x4, scoped, tag = 'scoped memory for tpu_custom_call.1']
    #allocation5 [shape = 'u8[32768]{0}', space=vmem, size = 0x8000, scoped, tag = 'input window, operand 1, single buffered']
    #allocation6 [shape = 's32[1]{0}', space=sflag, size = 0x4, scoped, tag = 'scoped memory for tpu_custom_call.1']
    #allocation7 [shape = 'u8[512]{0}', space=vmem, size = 0x400, scoped, tag = 'input window, operand 2, single buffered']
    #allocation8 [shape = 'u8[32768]{0}', space=vmem, size = 0x8000, scoped, tag = 'input window, operand 3, single buffered']
    #allocation9 [shape = 's32[1]{0}', space=sflag, size = 0x4, scoped, tag = 'scoped memory for tpu_custom_call.1']
    #allocation10 [shape = 'u8[512]{0}', space=vmem, size = 0x400, scoped, tag = 'input window, operand 4, single buffered']
    #allocation11 [shape = 'u8[32768]{0}', space=vmem, size = 0x8000, scoped, tag = 'input window, operand 5, single buffered']
    #allocation12 [shape = 's32[1]{0}', space=sflag, size = 0x4, scoped, tag = 'scoped memory for tpu_custom_call.1']
    #allocation13 [shape = 'u8[512]{0}', space=vmem, size = 0x400, scoped, tag = 'input window, operand 6, single buffered']
    #allocation14 [shape = 'u8[32768]{0}', space=vmem, size = 0x8000, scoped, tag = 'input window, operand 7, single buffered']
    #allocation15 [shape = 's32[1]{0}', space=sflag, size = 0x4, scoped, tag = 'scoped memory for tpu_custom_call.1']
    #allocation16 [shape = 'u8[512]{0}', space=vmem, size = 0x400, scoped, tag = 'input window, operand 8, single buffered']
    #allocation17 [shape = 'u8[4096]{0}', space=vmem, size = 0x1000, scoped, tag = 'output window, operand 0, single buffered']
    #allocation18 [shape = 'u8[4096]{0}', space=vmem, size = 0x1000, scoped, tag = 'output window, operand 1, single buffered']
    #allocation19 [shape = 's32[1]{0}', space=sflag, size = 0x4, scoped, tag = 'scoped memory for tpu_custom_call.1']
    #allocation20 [shape = 'u8[4096]{0}', space=vmem, size = 0x1000, scoped, tag = 'output window, operand 2, single buffered']
    %18 = vsyncpa [#allocation3], 0
    %19 = vsyncpa [#allocation6], 0
    %20 = vsyncpa [#allocation9], 0
    %21 = vsyncpa [#allocation12], 0
    %22 = vsyncpa [#allocation15], 0
    %23 = vsyncpa [#allocation4], 0
    %24 = vsyncpa [#allocation19], 0
    // Predicated region
    $region2: #{tpu_custom_call.1} parent=1 // pred_check
      _
    $region3: #{tpu_custom_call.1} parent=1 // pred_check_branch
      %26 = sbr.rel (0) target = $region5
    $region4: #{tpu_custom_call.1} parent=1 // pred_region
      %28 = vsyncadd [#allocation3], 0
      %s30 = sshll.u32 %s0, 4
      %s31 = int_to_ptr.hbm [resolvable:$true] %s30
      %s32 = sshll.u32 [#allocation2], 4
      %s33 = int_to_ptr.vmem [resolvable:$true] %s32
      %35 = dma.hbm_to_vmem [thread:$0]  %s31, 128, %s33, [#allocation3]
    $region5: #{tpu_custom_call.1} parent=1 // pred_fallthru
      _
    // Predicated region
    $region6: #{tpu_custom_call.1} parent=1 // pred_check
      _
    $region7: #{tpu_custom_call.1} parent=1 // pred_check_branch
      %37 = sbr.rel (0) target = $region9
    $region8: #{tpu_custom_call.1} parent=1 // pred_region
      %39 = vsyncadd [#allocation6], 0
      %s40 = sshll.u32 %s1, 4
      %s41 = int_to_ptr.hbm [resolvable:$true] %s40
      %s42 = sshll.u32 [#allocation5], 4
      %s43 = int_to_ptr.vmem [resolvable:$true] %s42
      %48 = dma.hbm_to_vmem [thread:$0]  %s41, 1024, %s43, [#allocation6], 64, 64, 4
    $region9: #{tpu_custom_call.1} parent=1 // pred_fallthru
      _
    // Predicated region
    $region10: #{tpu_custom_call.1} parent=1 // pred_check
      _
    $region11: #{tpu_custom_call.1} parent=1 // pred_check_branch
      %50 = sbr.rel (0) target = $region13
    $region12: #{tpu_custom_call.1} parent=1 // pred_region
      %52 = vsyncadd [#allocation6], 0
      %s54 = sshll.u32 %s2, 4
      %s55 = int_to_ptr.hbm [resolvable:$true] %s54
      %s56 = sshll.u32 [#allocation7], 4
      %s57 = int_to_ptr.vmem [resolvable:$true] %s56
      %59 = dma.hbm_to_vmem [thread:$0]  %s55, 16, %s57, [#allocation6]
    $region13: #{tpu_custom_call.1} parent=1 // pred_fallthru
      _
    // Predicated region
    $region14: #{tpu_custom_call.1} parent=1 // pred_check
      _
    $region15: #{tpu_custom_call.1} parent=1 // pred_check_branch
      %61 = sbr.rel (0) target = $region17
    $region16: #{tpu_custom_call.1} parent=1 // pred_region
      %63 = vsyncadd [#allocation9], 0
      %s64 = sshll.u32 %s3, 4
      %s65 = int_to_ptr.hbm [resolvable:$true] %s64
      %s66 = sshll.u32 [#allocation8], 4
      %s67 = int_to_ptr.vmem [resolvable:$true] %s66
      %72 = dma.hbm_to_vmem [thread:$0]  %s65, 1024, %s67, [#allocation9], 64, 64, 4
    $region17: #{tpu_custom_call.1} parent=1 // pred_fallthru
      _
    // Predicated region
    $region18: #{tpu_custom_call.1} parent=1 // pred_check
      _
    $region19: #{tpu_custom_call.1} parent=1 // pred_check_branch
      %74 = sbr.rel (0) target = $region21
    $region20: #{tpu_custom_call.1} parent=1 // pred_region
      %76 = vsyncadd [#allocation9], 0
      %s78 = sshll.u32 %s4, 4
      %s79 = int_to_ptr.hbm [resolvable:$true] %s78
      %s80 = sshll.u32 [#allocation10], 4
      %s81 = int_to_ptr.vmem [resolvable:$true] %s80
      %83 = dma.hbm_to_vmem [thread:$0]  %s79, 16, %s81, [#allocation9]
    $region21: #{tpu_custom_call.1} parent=1 // pred_fallthru
      _
    // Predicated region
    $region22: #{tpu_custom_call.1} parent=1 // pred_check
      _
    $region23: #{tpu_custom_call.1} parent=1 // pred_check_branch
      %85 = sbr.rel (0) target = $region25
    $region24: #{tpu_custom_call.1} parent=1 // pred_region
      %87 = vsyncadd [#allocation12], 0
      %s88 = sshll.u32 %s5, 4
      %s89 = int_to_ptr.hbm [resolvable:$true] %s88
      %s90 = sshll.u32 [#allocation11], 4
      %s91 = int_to_ptr.vmem [resolvable:$true] %s90
      %96 = dma.hbm_to_vmem [thread:$0]  %s89, 1024, %s91, [#allocation12], 64, 64, 4
    $region25: #{tpu_custom_call.1} parent=1 // pred_fallthru
      _
    // Predicated region
    $region26: #{tpu_custom_call.1} parent=1 // pred_check
      _
    $region27: #{tpu_custom_call.1} parent=1 // pred_check_branch
      %98 = sbr.rel (0) target = $region29
    $region28: #{tpu_custom_call.1} parent=1 // pred_region
      %100 = vsyncadd [#allocation12], 0
      %s102 = sshll.u32 %s6, 4
      %s103 = int_to_ptr.hbm [resolvable:$true] %s102
      %s104 = sshll.u32 [#allocation13], 4
      %s105 = int_to_ptr.vmem [resolvable:$true] %s104
      %107 = dma.hbm_to_vmem [thread:$0]  %s103, 16, %s105, [#allocation12]
    $region29: #{tpu_custom_call.1} parent=1 // pred_fallthru
      _
    // Predicated region
    $region30: #{tpu_custom_call.1} parent=1 // pred_check
      _
    $region31: #{tpu_custom_call.1} parent=1 // pred_check_branch
      %109 = sbr.rel (0) target = $region33
    $region32: #{tpu_custom_call.1} parent=1 // pred_region
      %111 = vsyncadd [#allocation15], 0
      %s112 = sshll.u32 %s7, 4
      %s113 = int_to_ptr.hbm [resolvable:$true] %s112
      %s114 = sshll.u32 [#allocation14], 4
      %s115 = int_to_ptr.vmem [resolvable:$true] %s114
      %120 = dma.hbm_to_vmem [thread:$0]  %s113, 1024, %s115, [#allocation15], 64, 64, 4
    $region33: #{tpu_custom_call.1} parent=1 // pred_fallthru
      _
    // Predicated region
    $region34: #{tpu_custom_call.1} parent=1 // pred_check
      _
    $region35: #{tpu_custom_call.1} parent=1 // pred_check_branch
      %122 = sbr.rel (0) target = $region37
    $region36: #{tpu_custom_call.1} parent=1 // pred_region
      %124 = vsyncadd [#allocation15], 0
      %s126 = sshll.u32 %s8, 4
      %s127 = int_to_ptr.hbm [resolvable:$true] %s126
      %s128 = sshll.u32 [#allocation16], 4
      %s129 = int_to_ptr.vmem [resolvable:$true] %s128
      %131 = dma.hbm_to_vmem [thread:$0]  %s127, 16, %s129, [#allocation15]
    $region37: #{tpu_custom_call.1} parent=1 // pred_fallthru
      _
    // Predicated region
    $region38: #{tpu_custom_call.1} parent=1 // pred_check
      _
    $region39: #{tpu_custom_call.1} parent=1 // pred_check_branch
      %133 = sbr.rel (0) target = $region41
    $region40: #{tpu_custom_call.1} parent=1 // pred_region
      _
    $region41: #{tpu_custom_call.1} parent=1 // pred_fallthru
      _
    // Predicated region
    $region42: #{tpu_custom_call.1} parent=1 // pred_check
      _
    $region43: #{tpu_custom_call.1} parent=1 // pred_check_branch
      %135 = sbr.rel (0) target = $region45
    $region44: #{tpu_custom_call.1} parent=1 // pred_region
      %137 = dma.done [#allocation3], 128
    $region45: #{tpu_custom_call.1} parent=1 // pred_fallthru
      _
    // Predicated region
    $region46: #{tpu_custom_call.1} parent=1 // pred_check
      _
    $region47: #{tpu_custom_call.1} parent=1 // pred_check_branch
      %139 = sbr.rel (0) target = $region49
    $region48: #{tpu_custom_call.1} parent=1 // pred_region
      %141 = dma.done [#allocation6], 1024
    $region49: #{tpu_custom_call.1} parent=1 // pred_fallthru
      _
    // Predicated region
    $region50: #{tpu_custom_call.1} parent=1 // pred_check
      _
    $region51: #{tpu_custom_call.1} parent=1 // pred_check_branch
      %143 = sbr.rel (0) target = $region53
    $region52: #{tpu_custom_call.1} parent=1 // pred_region
      %145 = dma.done [#allocation6], 16
    $region53: #{tpu_custom_call.1} parent=1 // pred_fallthru
      _
    // Predicated region
    $region54: #{tpu_custom_call.1} parent=1 // pred_check
      _
    $region55: #{tpu_custom_call.1} parent=1 // pred_check_branch
      %147 = sbr.rel (0) target = $region57
    $region56: #{tpu_custom_call.1} parent=1 // pred_region
      %149 = dma.done [#allocation9], 1024
    $region57: #{tpu_custom_call.1} parent=1 // pred_fallthru
      _
    // Predicated region
    $region58: #{tpu_custom_call.1} parent=1 // pred_check
      _
    $region59: #{tpu_custom_call.1} parent=1 // pred_check_branch
      %151 = sbr.rel (0) target = $region61
    $region60: #{tpu_custom_call.1} parent=1 // pred_region
      %153 = dma.done [#allocation9], 16
    $region61: #{tpu_custom_call.1} parent=1 // pred_fallthru
      _
    // Predicated region
    $region62: #{tpu_custom_call.1} parent=1 // pred_check
      _
    $region63: #{tpu_custom_call.1} parent=1 // pred_check_branch
      %155 = sbr.rel (0) target = $region65
    $region64: #{tpu_custom_call.1} parent=1 // pred_region
      %157 = dma.done [#allocation12], 1024
    $region65: #{tpu_custom_call.1} parent=1 // pred_fallthru
      _
    // Predicated region
    $region66: #{tpu_custom_call.1} parent=1 // pred_check
      _
    $region67: #{tpu_custom_call.1} parent=1 // pred_check_branch
      %159 = sbr.rel (0) target = $region69
    $region68: #{tpu_custom_call.1} parent=1 // pred_region
      %161 = dma.done [#allocation12], 16
    $region69: #{tpu_custom_call.1} parent=1 // pred_fallthru
      _
    // Predicated region
    $region70: #{tpu_custom_call.1} parent=1 // pred_check
      _
    $region71: #{tpu_custom_call.1} parent=1 // pred_check_branch
      %163 = sbr.rel (0) target = $region73
    $region72: #{tpu_custom_call.1} parent=1 // pred_region
      %165 = dma.done [#allocation15], 1024
    $region73: #{tpu_custom_call.1} parent=1 // pred_fallthru
      _
    // Predicated region
    $region74: #{tpu_custom_call.1} parent=1 // pred_check
      _
    $region75: #{tpu_custom_call.1} parent=1 // pred_check_branch
      %167 = sbr.rel (0) target = $region77
    $region76: #{tpu_custom_call.1} parent=1 // pred_region
      %169 = dma.done [#allocation15], 16
    $region77: #{tpu_custom_call.1} parent=1 // pred_fallthru
      _
    %v170 = vld [vmem:[#allocation2] sm:$0xff]
    %v171 = vpack.c.bf16 %v170, %v170
    %v172 = vld [vmem:[#allocation5] sm:$0xf]
    %v173 = vld [vmem:[#allocation5 + $0x4] sm:$0xf]
    %v174 = vld [vmem:[#allocation5 + $0x8] sm:$0xf]
    %v175 = vld [vmem:[#allocation5 + $0xc] sm:$0xf]
    %v176 = vld [vmem:[#allocation5 + $0x10] sm:$0xf]
    %v177 = vld [vmem:[#allocation5 + $0x14] sm:$0xf]
    %v178 = vld [vmem:[#allocation5 + $0x18] sm:$0xf]
    %v179 = vld [vmem:[#allocation5 + $0x1c] sm:$0xf]
    %v180 = vld [vmem:[#allocation5 + $0x20] sm:$0xf]
    %v181 = vld [vmem:[#allocation5 + $0x24] sm:$0xf]
    %v182 = vld [vmem:[#allocation5 + $0x28] sm:$0xf]
    %v183 = vld [vmem:[#allocation5 + $0x2c] sm:$0xf]
    %v184 = vld [vmem:[#allocation5 + $0x30] sm:$0xf]
    %v185 = vld [vmem:[#allocation5 + $0x34] sm:$0xf]
    %v186 = vld [vmem:[#allocation5 + $0x38] sm:$0xf]
    %v187 = vld [vmem:[#allocation5 + $0x3c] sm:$0xf]
    %v188 = vld [vmem:[#allocation7] sm:$0x1]
    %v190 = vperm.slane %v188, 0
    %v208 = vunpack.c.l.b16 %v172
    %v209 = vunpack.c.l.b16 %v173
    %v210 = vunpack.c.l.b16 %v174
    %v211 = vunpack.c.l.b16 %v175
    %v212 = vunpack.c.l.b16 %v176
    %v213 = vunpack.c.l.b16 %v177
    %v214 = vunpack.c.l.b16 %v178
    %v215 = vunpack.c.l.b16 %v179
    %v216 = vunpack.c.l.b16 %v180
    %v217 = vunpack.c.l.b16 %v181
    %v218 = vunpack.c.l.b16 %v182
    %v219 = vunpack.c.l.b16 %v183
    %v220 = vunpack.c.l.b16 %v184
    %v221 = vunpack.c.l.b16 %v185
    %v222 = vunpack.c.l.b16 %v186
    %v223 = vunpack.c.l.b16 %v187
    %v224 = vpack.c.b16 %v209, %v208
    %v225 = vpack.c.b16 %v211, %v210
    %v226 = vpack.c.b16 %v213, %v212
    %v227 = vpack.c.b16 %v215, %v214
    %v228 = vpack.c.b16 %v217, %v216
    %v229 = vpack.c.b16 %v219, %v218
    %v230 = vpack.c.b16 %v221, %v220
    %v231 = vpack.c.b16 %v223, %v222
    %240 = vmatpush.bf16.msra.mxu0 %v231
    %241 = vmatpush.bf16.msra.mxu0 %v230
    %242 = vmatpush.bf16.msra.mxu0 %v229
    %243 = vmatpush.bf16.msra.mxu0 %v228
    %244 = vmatpush.bf16.msra.mxu0 %v227
    %245 = vmatpush.bf16.msra.mxu0 %v226
    %246 = vmatpush.bf16.msra.mxu0 %v225
    %247 = vmatpush.bf16.msra.mxu0 %v224
    %248 = vmatmul.bf16.gmra.mxu0 %v171
    %v249 = vpop.f32.mrf.mxu0
    %v250 = vadd.f32 %v190, %v249
    %v251 = vpop.f32.mrf.mxu0
    %252 = vdwg.mxu0
    %v253 = vmax.f32 %v250, 0.0
    %v254 = vpack.c.bf16 %v253, %v253
    %v255 = vld [vmem:[#allocation8] sm:$0xf]
    %v256 = vld [vmem:[#allocation8 + $0x4] sm:$0xf]
    %v257 = vld [vmem:[#allocation8 + $0x8] sm:$0xf]
    %v258 = vld [vmem:[#allocation8 + $0xc] sm:$0xf]
    %v259 = vld [vmem:[#allocation8 + $0x10] sm:$0xf]
    %v260 = vld [vmem:[#allocation8 + $0x14] sm:$0xf]
    %v261 = vld [vmem:[#allocation8 + $0x18] sm:$0xf]
    %v262 = vld [vmem:[#allocation8 + $0x1c] sm:$0xf]
    %v263 = vld [vmem:[#allocation8 + $0x20] sm:$0xf]
    %v264 = vld [vmem:[#allocation8 + $0x24] sm:$0xf]
    %v265 = vld [vmem:[#allocation8 + $0x28] sm:$0xf]
    %v266 = vld [vmem:[#allocation8 + $0x2c] sm:$0xf]
    %v267 = vld [vmem:[#allocation8 + $0x30] sm:$0xf]
    %v268 = vld [vmem:[#allocation8 + $0x34] sm:$0xf]
    %v269 = vld [vmem:[#allocation8 + $0x38] sm:$0xf]
    %v270 = vld [vmem:[#allocation8 + $0x3c] sm:$0xf]
    %v271 = vld [vmem:[#allocation10] sm:$0x1]
    %v273 = vperm.slane %v271, 0
    %v291 = vunpack.c.l.b16 %v255
    %v292 = vunpack.c.l.b16 %v256
    %v293 = vunpack.c.l.b16 %v257
    %v294 = vunpack.c.l.b16 %v258
    %v295 = vunpack.c.l.b16 %v259
    %v296 = vunpack.c.l.b16 %v260
    %v297 = vunpack.c.l.b16 %v261
    %v298 = vunpack.c.l.b16 %v262
    %v299 = vunpack.c.l.b16 %v263
    %v300 = vunpack.c.l.b16 %v264
    %v301 = vunpack.c.l.b16 %v265
    %v302 = vunpack.c.l.b16 %v266
    %v303 = vunpack.c.l.b16 %v267
    %v304 = vunpack.c.l.b16 %v268
    %v305 = vunpack.c.l.b16 %v269
    %v306 = vunpack.c.l.b16 %v270
    %v307 = vpack.c.b16 %v292, %v291
    %v308 = vpack.c.b16 %v294, %v293
    %v309 = vpack.c.b16 %v296, %v295
    %v310 = vpack.c.b16 %v298, %v297
    %v311 = vpack.c.b16 %v300, %v299
    %v312 = vpack.c.b16 %v302, %v301
    %v313 = vpack.c.b16 %v304, %v303
    %v314 = vpack.c.b16 %v306, %v305
    %323 = vmatpush.bf16.msra.mxu0 %v314
    %324 = vmatpush.bf16.msra.mxu0 %v313
    %325 = vmatpush.bf16.msra.mxu0 %v312
    %326 = vmatpush.bf16.msra.mxu0 %v311
    %327 = vmatpush.bf16.msra.mxu0 %v310
    %328 = vmatpush.bf16.msra.mxu0 %v309
    %329 = vmatpush.bf16.msra.mxu0 %v308
    %330 = vmatpush.bf16.msra.mxu0 %v307
    %331 = vmatmul.bf16.gmra.mxu0 %v254
    %v332 = vpop.f32.mrf.mxu0
    %v333 = vadd.f32 %v273, %v332
    %v334 = vpop.f32.mrf.mxu0
    %335 = vdwg.mxu0
    %v336 = vmax.f32 %v333, 0.0
    %v337 = vpack.c.bf16 %v336, %v336
    %v338 = vld [vmem:[#allocation11] sm:$0xf]
    %v339 = vld [vmem:[#allocation11 + $0x4] sm:$0xf]
    %v340 = vld [vmem:[#allocation11 + $0x8] sm:$0xf]
    %v341 = vld [vmem:[#allocation11 + $0xc] sm:$0xf]
    %v342 = vld [vmem:[#allocation11 + $0x10] sm:$0xf]
    %v343 = vld [vmem:[#allocation11 + $0x14] sm:$0xf]
    %v344 = vld [vmem:[#allocation11 + $0x18] sm:$0xf]
    %v345 = vld [vmem:[#allocation11 + $0x1c] sm:$0xf]
    %v346 = vld [vmem:[#allocation11 + $0x20] sm:$0xf]
    %v347 = vld [vmem:[#allocation11 + $0x24] sm:$0xf]
    %v348 = vld [vmem:[#allocation11 + $0x28] sm:$0xf]
    %v349 = vld [vmem:[#allocation11 + $0x2c] sm:$0xf]
    %v350 = vld [vmem:[#allocation11 + $0x30] sm:$0xf]
    %v351 = vld [vmem:[#allocation11 + $0x34] sm:$0xf]
    %v352 = vld [vmem:[#allocation11 + $0x38] sm:$0xf]
    %v353 = vld [vmem:[#allocation11 + $0x3c] sm:$0xf]
    %v354 = vld [vmem:[#allocation13] sm:$0x1]
    %v356 = vperm.slane %v354, 0
    %v374 = vunpack.c.l.b16 %v338
    %v375 = vunpack.c.l.b16 %v339
    %v376 = vunpack.c.l.b16 %v340
    %v377 = vunpack.c.l.b16 %v341
    %v378 = vunpack.c.l.b16 %v342
    %v379 = vunpack.c.l.b16 %v343
    %v380 = vunpack.c.l.b16 %v344
    %v381 = vunpack.c.l.b16 %v345
    %v382 = vunpack.c.l.b16 %v346
    %v383 = vunpack.c.l.b16 %v347
    %v384 = vunpack.c.l.b16 %v348
    %v385 = vunpack.c.l.b16 %v349
    %v386 = vunpack.c.l.b16 %v350
    %v387 = vunpack.c.l.b16 %v351
    %v388 = vunpack.c.l.b16 %v352
    %v389 = vunpack.c.l.b16 %v353
    %v390 = vpack.c.b16 %v375, %v374
    %v391 = vpack.c.b16 %v377, %v376
    %v392 = vpack.c.b16 %v379, %v378
    %v393 = vpack.c.b16 %v381, %v380
    %v394 = vpack.c.b16 %v383, %v382
    %v395 = vpack.c.b16 %v385, %v384
    %v396 = vpack.c.b16 %v387, %v386
    %v397 = vpack.c.b16 %v389, %v388
    %406 = vmatpush.bf16.msra.mxu0 %v397
    %407 = vmatpush.bf16.msra.mxu0 %v396
    %408 = vmatpush.bf16.msra.mxu0 %v395
    %409 = vmatpush.bf16.msra.mxu0 %v394
    %410 = vmatpush.bf16.msra.mxu0 %v393
    %411 = vmatpush.bf16.msra.mxu0 %v392
    %412 = vmatpush.bf16.msra.mxu0 %v391
    %413 = vmatpush.bf16.msra.mxu0 %v390
    %414 = vmatmul.bf16.gmra.mxu0 %v337
    %v415 = vpop.f32.mrf.mxu0
    %v416 = vadd.f32 %v356, %v415
    %v417 = vpop.f32.mrf.mxu0
    %418 = vdwg.mxu0
    %v419 = vld [vmem:[#allocation14] sm:$0xf]
    %v420 = vld [vmem:[#allocation14 + $0x4] sm:$0xf]
    %v421 = vld [vmem:[#allocation14 + $0x8] sm:$0xf]
    %v422 = vld [vmem:[#allocation14 + $0xc] sm:$0xf]
    %v423 = vld [vmem:[#allocation14 + $0x10] sm:$0xf]
    %v424 = vld [vmem:[#allocation14 + $0x14] sm:$0xf]
    %v425 = vld [vmem:[#allocation14 + $0x18] sm:$0xf]
    %v426 = vld [vmem:[#allocation14 + $0x1c] sm:$0xf]
    %v427 = vld [vmem:[#allocation14 + $0x20] sm:$0xf]
    %v428 = vld [vmem:[#allocation14 + $0x24] sm:$0xf]
    %v429 = vld [vmem:[#allocation14 + $0x28] sm:$0xf]
    %v430 = vld [vmem:[#allocation14 + $0x2c] sm:$0xf]
    %v431 = vld [vmem:[#allocation14 + $0x30] sm:$0xf]
    %v432 = vld [vmem:[#allocation14 + $0x34] sm:$0xf]
    %v433 = vld [vmem:[#allocation14 + $0x38] sm:$0xf]
    %v434 = vld [vmem:[#allocation14 + $0x3c] sm:$0xf]
    %v435 = vld [vmem:[#allocation16] sm:$0x1]
    %v437 = vperm.slane %v435, 0
    %v455 = vunpack.c.l.b16 %v419
    %v456 = vunpack.c.l.b16 %v420
    %v457 = vunpack.c.l.b16 %v421
    %v458 = vunpack.c.l.b16 %v422
    %v459 = vunpack.c.l.b16 %v423
    %v460 = vunpack.c.l.b16 %v424
    %v461 = vunpack.c.l.b16 %v425
    %v462 = vunpack.c.l.b16 %v426
    %v463 = vunpack.c.l.b16 %v427
    %v464 = vunpack.c.l.b16 %v428
    %v465 = vunpack.c.l.b16 %v429
    %v466 = vunpack.c.l.b16 %v430
    %v467 = vunpack.c.l.b16 %v431
    %v468 = vunpack.c.l.b16 %v432
    %v469 = vunpack.c.l.b16 %v433
    %v470 = vunpack.c.l.b16 %v434
    %v471 = vpack.c.b16 %v456, %v455
    %v472 = vpack.c.b16 %v458, %v457
    %v473 = vpack.c.b16 %v460, %v459
    %v474 = vpack.c.b16 %v462, %v461
    %v475 = vpack.c.b16 %v464, %v463
    %v476 = vpack.c.b16 %v466, %v465
    %v477 = vpack.c.b16 %v468, %v467
    %v478 = vpack.c.b16 %v470, %v469
    %487 = vmatpush.bf16.msra.mxu0 %v478
    %488 = vmatpush.bf16.msra.mxu0 %v477
    %489 = vmatpush.bf16.msra.mxu0 %v476
    %490 = vmatpush.bf16.msra.mxu0 %v475
    %491 = vmatpush.bf16.msra.mxu0 %v474
    %492 = vmatpush.bf16.msra.mxu0 %v473
    %493 = vmatpush.bf16.msra.mxu0 %v472
    %494 = vmatpush.bf16.msra.mxu0 %v471
    %495 = vmatmul.bf16.gmra.mxu0 %v337
    %v496 = vpop.f32.mrf.mxu0
    %v497 = vadd.f32 %v437, %v496
    %v498 = vpop.f32.mrf.mxu0
    %499 = vdwg.mxu0
    %v500 = vmul.f32 %v497, 0.5
    %v501 = vmul.f32 %v500, 1.442695
    %v502 = vpow.pop %v501
    %v503 = vld [vmem:[%s9] sm:$0xff]
    %v504 = vmul.f32 %v502, %v503
    %v505 = vadd.f32 %v416, %v504
    %506 = vst [vmem:[#allocation17] sm:$0xff] %v505
    %507 = vst [vmem:[#allocation18] sm:$0xff] %v416
    %508 = vst [vmem:[#allocation20] sm:$0xff] %v497
    // Predicated region
    $region78: #{tpu_custom_call.1} parent=1 // pred_check
      _
    $region79: #{tpu_custom_call.1} parent=1 // pred_check_branch
      %510 = sbr.rel (0) target = $region81
    $region80: #{tpu_custom_call.1} parent=1 // pred_region
      %512 = vsyncadd [#allocation4], 0
      %s514 = sshll.u32 [#allocation17], 4
      %s515 = int_to_ptr.vmem [resolvable:$true] %s514
      %s516 = sshll.u32 %s10, 4
      %s517 = int_to_ptr.hbm [resolvable:$true] %s516
      %519 = dma.vmem_to_hbm [thread:$0]  %s515, 128, %s517, [#allocation4]
    $region81: #{tpu_custom_call.1} parent=1 // pred_fallthru
      _
    // Predicated region
    $region82: #{tpu_custom_call.1} parent=1 // pred_check
      _
    $region83: #{tpu_custom_call.1} parent=1 // pred_check_branch
      %521 = sbr.rel (0) target = $region85
    $region84: #{tpu_custom_call.1} parent=1 // pred_region
      %523 = vsyncadd [#allocation19], 0
      %s525 = sshll.u32 [#allocation18], 4
      %s526 = int_to_ptr.vmem [resolvable:$true] %s525
      %s527 = sshll.u32 %s11, 4
      %s528 = int_to_ptr.hbm [resolvable:$true] %s527
      %530 = dma.vmem_to_hbm [thread:$0]  %s526, 128, %s528, [#allocation19]
    $region85: #{tpu_custom_call.1} parent=1 // pred_fallthru
      _
    // Predicated region
    $region86: #{tpu_custom_call.1} parent=1 // pred_check
      _
    $region87: #{tpu_custom_call.1} parent=1 // pred_check_branch
      %532 = sbr.rel (0) target = $region89
    $region88: #{tpu_custom_call.1} parent=1 // pred_region
      %534 = vsyncadd [#allocation19], 0
      %s536 = sshll.u32 [#allocation20], 4
      %s537 = int_to_ptr.vmem [resolvable:$true] %s536
      %s538 = sshll.u32 %s12, 4
      %s539 = int_to_ptr.hbm [resolvable:$true] %s538
      %541 = dma.vmem_to_hbm [thread:$0]  %s537, 128, %s539, [#allocation19]
    $region89: #{tpu_custom_call.1} parent=1 // pred_fallthru
      _
    // Predicated region
    $region90: #{tpu_custom_call.1} parent=1 // pred_check
      _
    $region91: #{tpu_custom_call.1} parent=1 // pred_check_branch
      %543 = sbr.rel (0) target = $region93
    $region92: #{tpu_custom_call.1} parent=1 // pred_region
      %545 = dma.done [#allocation4], 128
    $region93: #{tpu_custom_call.1} parent=1 // pred_fallthru
      _
    // Predicated region
    $region94: #{tpu_custom_call.1} parent=1 // pred_check
      _
    $region95: #{tpu_custom_call.1} parent=1 // pred_check_branch
      %547 = sbr.rel (0) target = $region97
    $region96: #{tpu_custom_call.1} parent=1 // pred_region
      %549 = dma.done [#allocation19], 128
    $region97: #{tpu_custom_call.1} parent=1 // pred_fallthru
      _
    // Predicated region
    $region98: #{tpu_custom_call.1} parent=1 // pred_check
      _
    $region99: #{tpu_custom_call.1} parent=1 // pred_check_branch
      %551 = sbr.rel (0) target = $region101
    $region100: #{tpu_custom_call.1} parent=1 // pred_region
      %553 = dma.done [#allocation19], 128
    $region101: #{tpu_custom_call.1} parent=1 // pred_fallthru
      _
    %554 = vsyncpa [#allocation3], 1
    %555 = vsyncpa [#allocation6], 1
    %556 = vsyncpa [#allocation9], 1
    %557 = vsyncpa [#allocation12], 1
    %558 = vsyncpa [#allocation15], 1
    %559 = vsyncpa [#allocation4], 1
    %560 = vsyncpa [#allocation19], 1

</llo_original>
